<compile_context>
chip_gen: v7x
topology: tpu7x:2x2x1
jax: 0.10.0
libtpu: 0.0.40
codegen_flags: <defaults>
</compile_context>

<pallas_src>
import functools
import math

import jax
import jax.numpy as jnp
from jax import lax
from jax.experimental import pallas as pl
from jax.experimental.pallas import tpu as pltpu


def _attention_kernel(use_tanh, C,
                      q_ref, ref_ref, wr_ref, br_ref, v_ref,
                      e_ref, logits_ref):
    # q_ref     : (tB, D)        pre-projected query tile (Linear already applied)
    # ref_ref   : (tL, tB, D)    native (sourceL, batch, dim) tile
    # wr_ref    : (D, D)         Conv1d(k=1) weight, natural (out, in) orientation
    # br_ref    : (D, 1)         Conv1d bias as a column
    # v_ref     : (1, D)         v as a row
    # e_ref     : (tB, D, tL)    output block of e (B, D, L)
    # logits_ref: (tB, tL)       output block of logits (B, L)
    tL, tB, D = ref_ref.shape

    wr = wr_ref[...]                       # (D, D)
    br = br_ref[...]                       # (D, 1) broadcasts over the tL lanes
    v = v_ref[...]                         # (1, D)
    # One tiny (tB, D) -> (D, tB) transpose per grid step so each q row is
    # available as a (D, 1) column (matches the (D, tL) compute layout).
    q_t = q_ref[...].T                     # (D, tB)

    row = lax.broadcasted_iota(jnp.int32, (tB, tL), 0)
    logits_acc = jnp.zeros((tB, tL), jnp.float32)

    # tB <= 8; each iteration's large temporaries are consumed inside it, so the
    # static unroll carries only the small (tB, tL) logits accumulator.
    for b in range(tB):
        r_b = ref_ref[:, b, :]                                           # (tL, D)
        # NT contraction on the MXU: e^T_b[o, l] = sum_i wr[o, i] * ref[l, b, i]
        # -> already in the (dim, sourceL) layout required by the (B, D, L)
        #    output contract, so no per-b transpose is needed.
        e_t = lax.dot_general(wr, r_b, (((1,), (1,)), ((), ())),
                              preferred_element_type=jnp.float32) + br   # (D, tL)
        e_ref[b, :, :] = e_t.astype(e_ref.dtype)

        t_b = jnp.tanh(e_t + q_t[:, b:b + 1])                            # (D, tL)
        # v^T . tanh(q + e) on the MXU: (1, D) @ (D, tL) -> (1, tL)
        u_b = jnp.dot(v, t_b, preferred_element_type=jnp.float32)        # (1, tL)
        logits_acc = jnp.where(row == b,
                               jnp.broadcast_to(u_b, (tB, tL)),
                               logits_acc)

    if use_tanh:
        logits_acc = C * jnp.tanh(logits_acc)
    # Single dense (tB, tL) store instead of tB masked single-row stores.
    logits_ref[...] = logits_acc.astype(logits_ref.dtype)


def _vmem_capacity_bytes():
    """Per-core VMEM capacity (128 MiB on v5e/v6e, 64 MiB on v7x)."""
    try:
        info = pltpu.get_tpu_info()
        cap = getattr(info, "vmem_capacity_bytes", None)
        if cap:
            return int(cap)
    except Exception:
        pass
    return 64 * 1024 * 1024      # conservative fallback (v7x per-core VMEM)


def attention_forward(query, ref, params, *, use_tanh=False, C=10.0):
    """Pallas equivalent of Attention.forward.

    query : (B, D) float32
    ref   : (L, B, D) float32  (native PyTorch layout; NOT pre-permuted)
    params: dict with wq (D,D), bq (D,), wr (D,D), br (D,), v (D,)
    returns (e, logits) with e: (B, D, L), logits: (B, L)
    """
    B, D = query.shape
    L = ref.shape[0]
    assert ref.shape == (L, B, D)

    query = query.astype(jnp.float32)
    ref = ref.astype(jnp.float32)                      # native layout, no permute pass
    wq = params["wq"].astype(jnp.float32)
    bq = params["bq"].astype(jnp.float32)
    wr = params["wr"].astype(jnp.float32)              # (out, in), natural orientation
    br_col = params["br"].reshape(D, 1).astype(jnp.float32)
    v_row = params["v"].reshape(1, D).astype(jnp.float32)

    # Hoisted query projection: constant across the L grid axis, so it does not
    # belong inside the kernel (tiny B x D x D matmul in plain XLA).
    q = query @ wq.T + bq[None, :]                     # (B, D)

    # ---- per-generation tile / VMEM budgeting -----------------------------
    cap = _vmem_capacity_bytes()
    # ref block's second-minor dim (batch): must equal B or be a multiple of 8.
    tB = B if B <= 8 else 8

    weight_bytes = D * D * 4 + D * 512 + 8192          # wr + padded br/v (VMEM footprint)
    budget = max(4 * 1024 * 1024, int(cap * 0.6) - 2 * weight_bytes)
    # bytes per unit of tL (double-buffered ref block + e block + logits block)
    per_tl = 2 * (tB * D * 4 + tB * D * 4 + tB * 4)
    max_tl = max(8, budget // per_tl)

    # lane dim of the e / logits output blocks: must equal L or be a multiple of 128.
    if L <= max_tl:
        tL = L
    else:
        tL = (max_tl // 128) * 128
        if tL == 0:
            tL = 128                                   # smallest lane-dense tile
        tL = min(tL, L)

    # Megacore (v7x has 2 TensorCores): avoid a (1, 1) grid when L is big enough
    # to split into lane-dense tiles.
    if B <= tB and tL == L and L >= 256:
        tL = max(128, ((L // 2) // 128) * 128)

    grid = (pl.cdiv(B, tB), pl.cdiv(L, tL))

    ref_block = tL * tB * D * 4
    e_block = tB * D * tL * 4
    q_block = tB * D * 4
    logits_block = tB * tL * 4
    need = 2 * (ref_block + e_block + q_block + logits_block) + 2 * weight_bytes
    vmem_limit = min(max(16 * 1024 * 1024, int(need * 1.5) + (4 << 20)),
                     int(cap * 0.85))
    vmem_limit = int(max(vmem_limit, min(need + (2 << 20), cap - (4 << 20))))

    kernel = functools.partial(_attention_kernel, bool(use_tanh), float(C))

    e, logits = pl.pallas_call(
        kernel,
        out_shape=(
            jax.ShapeDtypeStruct((B, D, L), jnp.float32),
            jax.ShapeDtypeStruct((B, L), jnp.float32),
        ),
        grid_spec=pltpu.PrefetchScalarGridSpec(
            num_scalar_prefetch=0,
            grid=grid,
            in_specs=[
                pl.BlockSpec((tB, D), lambda bi, li: (bi, 0)),            # q (projected)
                pl.BlockSpec((tL, tB, D), lambda bi, li: (li, bi, 0)),    # ref (L, B, D)
                pl.BlockSpec((D, D), lambda bi, li: (0, 0)),              # wr   (resident)
                pl.BlockSpec((D, 1), lambda bi, li: (0, 0)),              # br   (resident)
                pl.BlockSpec((1, D), lambda bi, li: (0, 0)),              # v    (resident)
            ],
            out_specs=(
                pl.BlockSpec((tB, D, tL), lambda bi, li: (bi, 0, li)),    # e
                pl.BlockSpec((tB, tL), lambda bi, li: (bi, li)),          # logits
            ),
        ),
        compiler_params=pltpu.CompilerParams(
            dimension_semantics=("parallel", "parallel"),
            vmem_limit_bytes=vmem_limit,
        ),
    )(q, ref, wr, br_col, v_row)
    return e, logits


def init_params(key, dim):
    """Deterministic parameter init mirroring the PyTorch module shapes."""
    k1, k2, k3, k4, k5 = jax.random.split(key, 5)
    bound = 1.0 / math.sqrt(dim)
    wq = jax.random.uniform(k1, (dim, dim), jnp.float32, -bound, bound)
    bq = jax.random.uniform(k2, (dim,), jnp.float32, -bound, bound)
    # Conv1d(dim, dim, 1): weight (dim, dim, 1) -> kernel axis squeezed.
    wr = jax.random.uniform(k3, (dim, dim), jnp.float32, -bound, bound)
    br = jax.random.uniform(k4, (dim,), jnp.float32, -bound, bound)
    v = jax.random.uniform(k5, (dim,), jnp.float32, -bound, bound)
    return {"wq": wq, "bq": bq, "wr": wr, "br": br, "v": v}


def _reference(query, ref, params, use_tanh=False, C=10.0):
    refp = jnp.transpose(ref, (1, 2, 0))
    q = query @ params["wq"].T + params["bq"]
    e = jnp.einsum("oi,bil->bol", params["wr"], refp) + params["br"][None, :, None]
    u = jnp.einsum("d,bdl->bl", params["v"], jnp.tanh(q[:, :, None] + e))
    logits = C * jnp.tanh(u) if use_tanh else u
    return e, logits


if __name__ == "__main__":
    key = jax.random.PRNGKey(0)
    kq, kr, kp = jax.random.split(key, 3)

    batch, dim, source_len = 2, 32, 8
    query = jax.random.normal(kq, (batch, dim), jnp.float32)
    ref = jax.random.normal(kr, (source_len, batch, dim), jnp.float32)
    params = init_params(kp, dim)

    for use_tanh in (False, True):
        e, logits = attention_forward(query, ref, params, use_tanh=use_tanh, C=10.0)
        e = jax.block_until_ready(e)
        logits = jax.block_until_ready(logits)

        e_ref, logits_ref = _reference(query, ref, params, use_tanh=use_tanh, C=10.0)
        assert e.shape == (batch, dim, source_len)
        assert logits.shape == (batch, source_len)
        assert jnp.allclose(e, e_ref, atol=1e-4, rtol=1e-4), \
            float(jnp.max(jnp.abs(e - e_ref)))
        assert jnp.allclose(logits, logits_ref, atol=1e-4, rtol=1e-4), \
            float(jnp.max(jnp.abs(logits - logits_ref)))

    print("KERNEL_OK")
</pallas_src>

<mosaic_0001>
module attributes {stable_mosaic.version = 11 : i64} {
  func.func @_attention_kernel(%arg0: i32, %arg1: i32, %arg2: memref<2x32xf32, #tpu.memory_space<vmem>>, %arg3: memref<8x2x32xf32, #tpu.memory_space<vmem>>, %arg4: memref<32x32xf32, #tpu.memory_space<vmem>>, %arg5: memref<32x1xf32, #tpu.memory_space<vmem>>, %arg6: memref<1x32xf32, #tpu.memory_space<vmem>>, %arg7: memref<2x32x8xf32, #tpu.memory_space<vmem>>, %arg8: memref<2x8xf32, #tpu.memory_space<vmem>>) attributes {dimension_semantics = [#tpu.dimension_semantics<parallel>, #tpu.dimension_semantics<parallel>], iteration_bounds = array<i64: 1, 1>, scalar_prefetch = 0 : i64, scratch_operands = 0 : i64, tpu.core_type = #tpu.core_type<tc>, window_params = [{transform_indices = @transform_0, window_bounds = array<i64: 2, 32>}, {transform_indices = @transform_1, window_bounds = array<i64: 8, 2, 32>}, {pipeline_mode = #tpu.pipeline_mode<synchronous>, transform_indices = @transform_2, window_bounds = array<i64: 32, 32>}, {pipeline_mode = #tpu.pipeline_mode<synchronous>, transform_indices = @transform_3, window_bounds = array<i64: 32, 1>}, {pipeline_mode = #tpu.pipeline_mode<synchronous>, transform_indices = @transform_4, window_bounds = array<i64: 1, 32>}, {transform_indices = @transform_5, window_bounds = array<i64: 2, 32, 8>}, {transform_indices = @transform_6, window_bounds = array<i64: 2, 8>}]} {
    %c0 = arith.constant 0 : index
    %c0_0 = arith.constant 0 : index
    %0 = vector.load %arg4[%c0, %c0_0] : memref<32x32xf32, #tpu.memory_space<vmem>>, vector<32x32xf32>
    %c0_1 = arith.constant 0 : index
    %c0_2 = arith.constant 0 : index
    %1 = vector.load %arg5[%c0_1, %c0_2] : memref<32x1xf32, #tpu.memory_space<vmem>>, vector<32x1xf32>
    %c0_3 = arith.constant 0 : index
    %c0_4 = arith.constant 0 : index
    %2 = vector.load %arg6[%c0_3, %c0_4] : memref<1x32xf32, #tpu.memory_space<vmem>>, vector<1x32xf32>
    %c0_5 = arith.constant 0 : index
    %c0_6 = arith.constant 0 : index
    %3 = vector.load %arg2[%c0_5, %c0_6] : memref<2x32xf32, #tpu.memory_space<vmem>>, vector<2x32xf32>
    %4 = tpu.transpose %3, [1, 0] : vector<2x32xf32> -> vector<32x2xf32>
    %5 = tpu.iota {dimensions = array<i32: 0>} : vector<2x8xi32>
    %cst = arith.constant 0.000000e+00 : f32
    %6 = vector.broadcast %cst : f32 to vector<2x8xf32>
    %c0_7 = arith.constant 0 : index
    %c0_8 = arith.constant 0 : index
    %c0_9 = arith.constant 0 : index
    %7 = vector.load %arg3[%c0_7, %c0_8, %c0_9] : memref<8x2x32xf32, #tpu.memory_space<vmem>>, vector<8x1x32xf32>
    %8 = vector.shape_cast %7 : vector<8x1x32xf32> to vector<8x32xf32>
    %cst_10 = arith.constant dense<0.000000e+00> : vector<32x8xf32>
    %9 = tpu.matmul %0, %8, %cst_10 {dimension_numbers = #tpu.dot_dimension_numbers<[1], [1], [0], [0], [0, 0, 1, 0], [], []>} : vector<32x32xf32>, vector<8x32xf32>, vector<32x8xf32> -> vector<32x8xf32>
    %10 = vector.broadcast %1 : vector<32x1xf32> to vector<32x8xf32>
    %11 = arith.addf %9, %10 : vector<32x8xf32>
    %c0_11 = arith.constant 0 : index
    %c0_12 = arith.constant 0 : index
    %c0_13 = arith.constant 0 : index
    %12 = vector.load %arg7[%c0_11, %c0_12, %c0_13] : memref<2x32x8xf32, #tpu.memory_space<vmem>>, vector<1x32x8xf32>
    %13 = vector.shape_cast %12 : vector<1x32x8xf32> to vector<32x8xf32>
    %14 = vector.shape_cast %11 : vector<32x8xf32> to vector<1x32x8xf32>
    tpu.vector_store %arg7[%c0_11, %c0_12, %c0_13], %14 {strides = array<i32>} : memref<2x32x8xf32, #tpu.memory_space<vmem>>, vector<1x32x8xf32>,
    %15 = vector.extract_strided_slice %4 {offsets = [0, 0], sizes = [32, 1], strides = [1, 1]} : vector<32x2xf32> to vector<32x1xf32>
    %16 = vector.broadcast %15 : vector<32x1xf32> to vector<32x8xf32>
    %17 = arith.addf %11, %16 : vector<32x8xf32>
    %18 = math.tanh %17 : vector<32x8xf32>
    %cst_14 = arith.constant dense<0.000000e+00> : vector<1x8xf32>
    %19 = tpu.matmul %2, %18, %cst_14 {dimension_numbers = #tpu.dot_dimension_numbers<[1], [0], [0], [1], [0, 0, 1, 1], [], []>} : vector<1x32xf32>, vector<32x8xf32>, vector<1x8xf32> -> vector<1x8xf32>
    %c0_i32 = arith.constant 0 : i32
    %20 = vector.broadcast %c0_i32 : i32 to vector<2x8xi32>
    %21 = arith.cmpi eq, %5, %20 : vector<2x8xi32>
    %22 = vector.shape_cast %19 : vector<1x8xf32> to vector<1x8xf32>
    %23 = vector.broadcast %22 : vector<1x8xf32> to vector<2x8xf32>
    %24 = arith.select %21, %23, %6 : vector<2x8xi1>, vector<2x8xf32>
    %c0_15 = arith.constant 0 : index
    %c1 = arith.constant 1 : index
    %c0_16 = arith.constant 0 : index
    %25 = vector.load %arg3[%c0_15, %c1, %c0_16] : memref<8x2x32xf32, #tpu.memory_space<vmem>>, vector<8x1x32xf32>
    %26 = vector.shape_cast %25 : vector<8x1x32xf32> to vector<8x32xf32>
    %cst_17 = arith.constant dense<0.000000e+00> : vector<32x8xf32>
    %27 = tpu.matmul %0, %26, %cst_17 {dimension_numbers = #tpu.dot_dimension_numbers<[1], [1], [0], [0], [0, 0, 1, 0], [], []>} : vector<32x32xf32>, vector<8x32xf32>, vector<32x8xf32> -> vector<32x8xf32>
    %28 = vector.broadcast %1 : vector<32x1xf32> to vector<32x8xf32>
    %29 = arith.addf %27, %28 : vector<32x8xf32>
    %c1_18 = arith.constant 1 : index
    %c0_19 = arith.constant 0 : index
    %c0_20 = arith.constant 0 : index
    %30 = vector.load %arg7[%c1_18, %c0_19, %c0_20] : memref<2x32x8xf32, #tpu.memory_space<vmem>>, vector<1x32x8xf32>
    %31 = vector.shape_cast %30 : vector<1x32x8xf32> to vector<32x8xf32>
    %32 = vector.shape_cast %29 : vector<32x8xf32> to vector<1x32x8xf32>
    tpu.vector_store %arg7[%c1_18, %c0_19, %c0_20], %32 {strides = array<i32>} : memref<2x32x8xf32, #tpu.memory_space<vmem>>, vector<1x32x8xf32>,
    %33 = vector.extract_strided_slice %4 {offsets = [0, 1], sizes = [32, 1], strides = [1, 1]} : vector<32x2xf32> to vector<32x1xf32>
    %34 = vector.broadcast %33 : vector<32x1xf32> to vector<32x8xf32>
    %35 = arith.addf %29, %34 : vector<32x8xf32>
    %36 = math.tanh %35 : vector<32x8xf32>
    %cst_21 = arith.constant dense<0.000000e+00> : vector<1x8xf32>
    %37 = tpu.matmul %2, %36, %cst_21 {dimension_numbers = #tpu.dot_dimension_numbers<[1], [0], [0], [1], [0, 0, 1, 1], [], []>} : vector<1x32xf32>, vector<32x8xf32>, vector<1x8xf32> -> vector<1x8xf32>
    %c1_i32 = arith.constant 1 : i32
    %38 = vector.broadcast %c1_i32 : i32 to vector<2x8xi32>
    %39 = arith.cmpi eq, %5, %38 : vector<2x8xi32>
    %40 = vector.shape_cast %37 : vector<1x8xf32> to vector<1x8xf32>
    %41 = vector.broadcast %40 : vector<1x8xf32> to vector<2x8xf32>
    %42 = arith.select %39, %41, %24 : vector<2x8xi1>, vector<2x8xf32>
    %c0_22 = arith.constant 0 : index
    %c0_23 = arith.constant 0 : index
    %43 = vector.load %arg8[%c0_22, %c0_23] : memref<2x8xf32, #tpu.memory_space<vmem>>, vector<2x8xf32>
    tpu.vector_store %arg8[%c0_22, %c0_23], %42 {strides = array<i32>} : memref<2x8xf32, #tpu.memory_space<vmem>>, vector<2x8xf32>,
    return
  }
  func.func @transform_0(%arg0: i32, %arg1: i32) -> (i32, i32) {
    %c0_i32 = arith.constant 0 : i32
    %c0_i32_0 = arith.constant 0 : i32
    return %arg0, %c0_i32 : i32, i32
  }
  func.func @transform_1(%arg0: i32, %arg1: i32) -> (i32, i32, i32) {
    %c0_i32 = arith.constant 0 : i32
    %c0_i32_0 = arith.constant 0 : i32
    return %arg1, %arg0, %c0_i32 : i32, i32, i32
  }
  func.func @transform_2(%arg0: i32, %arg1: i32) -> (i32, i32) {
    %c0_i32 = arith.constant 0 : i32
    %c0_i32_0 = arith.constant 0 : i32
    %c0_i32_1 = arith.constant 0 : i32
    return %c0_i32, %c0_i32_0 : i32, i32
  }
  func.func @transform_3(%arg0: i32, %arg1: i32) -> (i32, i32) {
    %c0_i32 = arith.constant 0 : i32
    %c0_i32_0 = arith.constant 0 : i32
    %c0_i32_1 = arith.constant 0 : i32
    return %c0_i32, %c0_i32_0 : i32, i32
  }
  func.func @transform_4(%arg0: i32, %arg1: i32) -> (i32, i32) {
    %c0_i32 = arith.constant 0 : i32
    %c0_i32_0 = arith.constant 0 : i32
    %c0_i32_1 = arith.constant 0 : i32
    return %c0_i32, %c0_i32_0 : i32, i32
  }
  func.func @transform_5(%arg0: i32, %arg1: i32) -> (i32, i32, i32) {
    %c0_i32 = arith.constant 0 : i32
    %c0_i32_0 = arith.constant 0 : i32
    return %arg0, %c0_i32, %arg1 : i32, i32, i32
  }
  func.func @transform_6(%arg0: i32, %arg1: i32) -> (i32, i32) {
    %c0_i32 = arith.constant 0 : i32
    return %arg0, %arg1 : i32, i32
  }
}

</mosaic_0001>

<llo_original>
// kernel: tpu_custom_call.1
$region0: #{tpu_custom_call.1}
  #allocation0 [shape = 'u32[]', space=smem, size = 0x4, offset = 0x4, fixed_abs, tag = 'smem constant byte address 0x4 - core index']
  #allocation1 [shape = 'u32[144,128]{1,0:T(1,128)}', space=vmem, size = 0x12000, scoped, tag = 'internal scratch']
  %s0 = inlined_call_operand.vmem [shape: f32[2,32], index: 0, kind: input, shape index: {}]
  %s1 = inlined_call_operand.hbm [shape: f32[8,2,32], index: 1, kind: input, shape index: {}]
  %s2 = inlined_call_operand.vmem [shape: f32[32,32], index: 2, kind: input, shape index: {}]
  %s3 = inlined_call_operand.vmem [shape: f32[32,1], index: 3, kind: input, shape index: {}]
  %s4 = inlined_call_operand.vmem [shape: f32[1,32], index: 4, kind: input, shape index: {}]
  %s5 = inlined_call_operand.vmem [shape: f32[2,32,8], index: 5, kind: output, shape index: {0}]
  %s6 = inlined_call_operand.hbm [shape: f32[2,8], index: 6, kind: output, shape index: {1}]
  %7 = xla_tuple %s5, %s6
  %s8 = sld [smem:[#allocation0]]
  $region42: #{tpu_custom_call.1} parent=0
    _
  %s10 = ssub.s32 1, %s8
  %s11 = scalar_select 0, %s10, %s8
  $region1: #{tpu_custom_call.1} parent=0
    #allocation2 [shape = 'u8[8192]{0}', space=vmem, size = 0x2000, scoped, tag = 'input window, operand 1, single buffered']
    #allocation3 [shape = 's32[1]{0}', space=sflag, size = 0x4, scoped, tag = 'scoped memory for tpu_custom_call.1']
    #allocation4 [shape = 's32[1]{0}', space=sflag, size = 0x4, scoped, tag = 'scoped memory for tpu_custom_call.1']
    #allocation5 [shape = 'u8[1024]{0}', space=vmem, size = 0x400, scoped, tag = 'output window, operand 1, single buffered']
    %12 = vsyncpa [#allocation3], 0
    %13 = vsyncpa [#allocation4], 0
    // Predicated region
    $region2: #{tpu_custom_call.1} parent=1 // pred_check
      _
    $region3: #{tpu_custom_call.1} parent=1 // pred_check_branch
      %15 = sbr.rel (0) target = $region5
    $region4: #{tpu_custom_call.1} parent=1 // pred_region
      _
    $region5: #{tpu_custom_call.1} parent=1 // pred_fallthru
      _
    // Predicated region
    $region6: #{tpu_custom_call.1} parent=1 // pred_check
      _
    $region7: #{tpu_custom_call.1} parent=1 // pred_check_branch
      %17 = sbr.rel (0) target = $region9
    $region8: #{tpu_custom_call.1} parent=1 // pred_region
      %s19 = ssub.s32 256, 256
      %20 = vsyncadd [#allocation3], %s19
      %s21 = sshll.u32 [#allocation2], 4
      %s22 = int_to_ptr.vmem [resolvable:$true] %s21
      %27 = dma.hbm_to_vmem [thread:$0]  %s1, 256, %s22, [#allocation3], 32, 32, 2
    $region9: #{tpu_custom_call.1} parent=1 // pred_fallthru
      _
    // Predicated region
    $region10: #{tpu_custom_call.1} parent=1 // pred_check
      _
    $region11: #{tpu_custom_call.1} parent=1 // pred_check_branch
      %29 = sbr.rel (0) target = $region13
    $region12: #{tpu_custom_call.1} parent=1 // pred_region
      _
    $region13: #{tpu_custom_call.1} parent=1 // pred_fallthru
      _
    // Predicated region
    $region14: #{tpu_custom_call.1} parent=1 // pred_check
      _
    $region15: #{tpu_custom_call.1} parent=1 // pred_check_branch
      %31 = sbr.rel (0) target = $region17
    $region16: #{tpu_custom_call.1} parent=1 // pred_region
      _
    $region17: #{tpu_custom_call.1} parent=1 // pred_fallthru
      _
    // Predicated region
    $region18: #{tpu_custom_call.1} parent=1 // pred_check
      _
    $region19: #{tpu_custom_call.1} parent=1 // pred_check_branch
      %33 = sbr.rel (0) target = $region21
    $region20: #{tpu_custom_call.1} parent=1 // pred_region
      _
    $region21: #{tpu_custom_call.1} parent=1 // pred_fallthru
      _
    // Predicated region
    $region22: #{tpu_custom_call.1} parent=1 // pred_check
      _
    $region23: #{tpu_custom_call.1} parent=1 // pred_check_branch
      %35 = sbr.rel (0) target = $region25
    $region24: #{tpu_custom_call.1} parent=1 // pred_region
      %36 = dma.done [#allocation3], 256
    $region25: #{tpu_custom_call.1} parent=1 // pred_fallthru
      _
    %v37 = vld [vmem:[%s2] sm:$0xff]
    %v38 = vld [vmem:[%s2 + $0x8] sm:$0xff]
    %v39 = vld [vmem:[%s2 + $0x10] sm:$0xff]
    %v40 = vld [vmem:[%s2 + $0x18] sm:$0xff]
    %v41 = vld [vmem:[%s3] sm:$0xff]
    %v42 = vld [vmem:[%s3 + $0x8] sm:$0xff]
    %v43 = vld [vmem:[%s3 + $0x10] sm:$0xff]
    %v44 = vld [vmem:[%s3 + $0x18] sm:$0xff]
    %v45 = vld [vmem:[%s4] sm:$0x1]
    %v46 = vld [vmem:[%s0] sm:$0x3]
    %47 = vxpose.xlu0.b32.start [1/16] %v46, 128
    %48 = vxpose.xlu0.b32.cont [2/16] 0.0, 128
    %49 = vxpose.xlu0.b32.cont [3/16] 0.0, 128
    %50 = vxpose.xlu0.b32.cont [4/16] 0.0, 128
    %51 = vxpose.xlu0.b32.cont [5/16] 0.0, 128
    %52 = vxpose.xlu0.b32.cont [6/16] 0.0, 128
    %53 = vxpose.xlu0.b32.cont [7/16] 0.0, 128
    %54 = vxpose.xlu0.b32.cont [8/16] 0.0, 128
    %55 = vxpose.xlu0.b32.cont [9/16] 0.0, 128
    %56 = vxpose.xlu0.b32.cont [10/16] 0.0, 128
    %57 = vxpose.xlu0.b32.cont [11/16] 0.0, 128
    %58 = vxpose.xlu0.b32.cont [12/16] 0.0, 128
    %59 = vxpose.xlu0.b32.cont [13/16] 0.0, 128
    %60 = vxpose.xlu0.b32.cont [14/16] 0.0, 128
    %61 = vxpose.xlu0.b32.cont [15/16] 0.0, 128
    %62 = vxpose.xlu0.b32.end [16/16] 0.0, 128
    %v63 = vpop.trf.xlu0
    %v64 = vpop.trf.xlu0
    %v65 = vpop.trf.xlu0
    %v66 = vpop.trf.xlu0
    %v67 = vpop.trf.xlu0
    %v68 = vpop.trf.xlu0
    %v69 = vpop.trf.xlu0
    %v70 = vpop.trf.xlu0
    %v71 = vpop.trf.xlu0
    %v72 = vpop.trf.xlu0
    %v73 = vpop.trf.xlu0
    %v74 = vpop.trf.xlu0
    %v75 = vpop.trf.xlu0
    %v76 = vpop.trf.xlu0
    %v77 = vpop.trf.xlu0
    %v78 = vpop.trf.xlu0
    %v79 = vlaneseq
    %v80 = vshrl.u32 %v79, 7
    %v81 = vld [vmem:[#allocation2] sm:$0x1]
    %v82 = vld [vmem:[#allocation2 + $0x2] sm:$0x1]
    %v83 = vld [vmem:[#allocation2 + $0x4] sm:$0x1]
    %v84 = vld [vmem:[#allocation2 + $0x6] sm:$0x1]
    %v85 = vld [vmem:[#allocation2 + $0x8] sm:$0x1]
    %v86 = vld [vmem:[#allocation2 + $0xa] sm:$0x1]
    %v87 = vld [vmem:[#allocation2 + $0xc] sm:$0x1]
    %v88 = vld [vmem:[#allocation2 + $0xe] sm:$0x1]
    %90 = vset.pattern.permute.xlu0 0
    %91 = vperm.xlu0 %90, %v41
    %v92 = vpop.permute.xlu0 %91
    %95 = vset.pattern.permute.xlu0 0
    %96 = vperm.xlu0 %95, %v42
    %v97 = vpop.permute.xlu0 %96
    %100 = vset.pattern.permute.xlu0 0
    %101 = vperm.xlu0 %100, %v43
    %v102 = vpop.permute.xlu0 %101
    %105 = vset.pattern.permute.xlu0 0
    %106 = vperm.xlu0 %105, %v44
    %v107 = vpop.permute.xlu0 %106
    %v117 = vrot.slane %v82, 7
    %vm118 = vcmask 1041409
    %v119 = vsel %vm118, %v117, %v81
    %v120 = vrot.slane %v83, 6
    %vm121 = vcmask 1042434
    %v122 = vsel %vm121, %v120, %v119
    %v123 = vrot.slane %v84, 5
    %vm124 = vcmask 1043459
    %v125 = vsel %vm124, %v123, %v122
    %v126 = vrot.slane %v85, 4
    %vm127 = vcmask 1044484
    %v128 = vsel %vm127, %v126, %v125
    %v129 = vrot.slane %v86, 3
    %vm130 = vcmask 1045509
    %v131 = vsel %vm130, %v129, %v128
    %v132 = vrot.slane %v87, 2
    %vm133 = vcmask 1046534
    %v134 = vsel %vm133, %v132, %v131
    %v135 = vrot.slane %v88, 1
    %vm136 = vcmask 1047559
    %v137 = vsel %vm136, %v135, %v134
    %vm138 = vcmask 261120
    %v140 = vsel %vm138, %v37, 0
    %v143 = vsel %vm138, %v38, 0
    %v146 = vsel %vm138, %v39, 0
    %v149 = vsel %vm138, %v40, 0
    %v151 = vsel %vm138, %v137, 0
    %153 = vmatprep.subr.mxu0 0.0
    %154 = vmatpush1.xpose.msra.mxu0 %v151
    %155 = vmatprep.subr.mxu0 0.0
    %156 = vmatpush1.xpose.msra.mxu0 0.0
    %157 = vmatprep.subr.mxu0 0.0
    %158 = vmatpush1.xpose.msra.mxu0 0.0
    %159 = vmatprep.subr.mxu0 0.0
    %160 = vmatpush1.xpose.msra.mxu0 0.0
    %161 = vmatprep.subr.mxu0 0.0
    %162 = vmatpush1.xpose.msra.mxu0 0.0
    %163 = vmatprep.subr.mxu0 0.0
    %164 = vmatpush1.xpose.msra.mxu0 0.0
    %165 = vmatprep.subr.mxu0 0.0
    %166 = vmatpush1.xpose.msra.mxu0 0.0
    %167 = vmatprep.subr.mxu0 0.0
    %168 = vmatpush1.xpose.msra.mxu0 0.0
    %169 = vmatprep.subr.mxu0 0.0
    %170 = vmatpush1.xpose.msra.mxu0 0.0
    %171 = vmatprep.subr.mxu0 0.0
    %172 = vmatpush1.xpose.msra.mxu0 0.0
    %173 = vmatprep.subr.mxu0 0.0
    %174 = vmatpush1.xpose.msra.mxu0 0.0
    %175 = vmatprep.subr.mxu0 0.0
    %176 = vmatpush1.xpose.msra.mxu0 0.0
    %177 = vmatprep.subr.mxu0 0.0
    %178 = vmatpush1.xpose.msra.mxu0 0.0
    %179 = vmatprep.subr.mxu0 0.0
    %180 = vmatpush1.xpose.msra.mxu0 0.0
    %181 = vmatprep.subr.mxu0 0.0
    %182 = vmatpush1.xpose.msra.mxu0 0.0
    %183 = vmatprep.subr.mxu0 0.0
    %184 = vmatpush1.xpose.msra.mxu0 0.0
    %185 = vmatprep.subr.mxu0 0.0
    %186 = vmatpush1.xpose.msra.mxu0 0.0
    %187 = vmatprep.subr.mxu0 0.0
    %188 = vmatpush1.xpose.msra.mxu0 0.0
    %189 = vmatprep.subr.mxu0 0.0
    %190 = vmatpush1.xpose.msra.mxu0 0.0
    %191 = vmatprep.subr.mxu0 0.0
    %192 = vmatpush1.xpose.msra.mxu0 0.0
    %193 = vmatprep.subr.mxu0 0.0
    %194 = vmatpush1.xpose.msra.mxu0 0.0
    %195 = vmatprep.subr.mxu0 0.0
    %196 = vmatpush1.xpose.msra.mxu0 0.0
    %197 = vmatprep.subr.mxu0 0.0
    %198 = vmatpush1.xpose.msra.mxu0 0.0
    %199 = vmatprep.subr.mxu0 0.0
    %200 = vmatpush1.xpose.msra.mxu0 0.0
    %201 = vmatprep.subr.mxu0 0.0
    %202 = vmatpush1.xpose.msra.mxu0 0.0
    %203 = vmatprep.subr.mxu0 0.0
    %204 = vmatpush1.xpose.msra.mxu0 0.0
    %205 = vmatprep.subr.mxu0 0.0
    %206 = vmatpush1.xpose.msra.mxu0 0.0
    %207 = vmatprep.subr.mxu0 0.0
    %208 = vmatpush1.xpose.msra.mxu0 0.0
    %209 = vmatprep.subr.mxu0 0.0
    %210 = vmatpush1.xpose.msra.mxu0 0.0
    %211 = vmatprep.subr.mxu0 0.0
    %212 = vmatpush1.xpose.msra.mxu0 0.0
    %213 = vmatprep.subr.mxu0 0.0
    %214 = vmatpush1.xpose.msra.mxu0 0.0
    %215 = vmatprep.subr.mxu0 0.0
    %216 = vmatpush1.xpose.msra.mxu0 0.0
    %217 = vmatprep.mubr.f32.mxu0 0.0
    %218 = vmatmul.mubr.f32.gmra.mrb[0].mxu0 %v140
    %v219 = vpop.f32.mrb[0].mxu0
    %v220 = vadd.f32 %v92, %v219
    %v221 = vpop.f32.mrb[0].mxu0
    %222 = vmatprep.mubr.f32.mxu0 0.0
    %223 = vmatmul.mubr.f32.gmra.mrb[0].mxu0 %v143
    %v224 = vpop.f32.mrb[0].mxu0
    %v225 = vadd.f32 %v97, %v224
    %v226 = vpop.f32.mrb[0].mxu0
    %227 = vmatprep.mubr.f32.mxu0 0.0
    %228 = vmatmul.mubr.f32.gmra.mrb[0].mxu0 %v146
    %v229 = vpop.f32.mrb[0].mxu0
    %v230 = vadd.f32 %v102, %v229
    %v231 = vpop.f32.mrb[0].mxu0
    %232 = vmatprep.mubr.f32.mxu0 0.0
    %233 = vmatmul.mubr.f32.gmra.mrb[0].mxu0 %v149
    %v234 = vpop.f32.mrb[0].mxu0
    %v235 = vadd.f32 %v107, %v234
    %v236 = vpop.f32.mrb[0].mxu0
    %237 = vdwg.mxu0
    %vm238 = vcmask 64512
    %239 = vst.msk [vmem:[%s5] sm:$0xff] %vm238, %v220
    %240 = vst.msk [vmem:[%s5 + $0x8] sm:$0xff] %vm238, %v225
    %241 = vst.msk [vmem:[%s5 + $0x10] sm:$0xff] %vm238, %v230
    %242 = vst.msk [vmem:[%s5 + $0x18] sm:$0xff] %vm238, %v235
    %244 = vset.pattern.permute.xlu0 0
    %245 = vperm.xlu0 %244, %v63
    %v246 = vpop.permute.xlu0 %245
    %249 = vset.pattern.permute.xlu0 0
    %250 = vperm.xlu0 %249, %v64
    %v251 = vpop.permute.xlu0 %250
    %254 = vset.pattern.permute.xlu0 0
    %255 = vperm.xlu0 %254, %v65
    %v256 = vpop.permute.xlu0 %255
    %259 = vset.pattern.permute.xlu0 0
    %260 = vperm.xlu0 %259, %v66
    %v261 = vpop.permute.xlu0 %260
    %v263 = vadd.f32 %v220, %v246
    %v264 = vadd.f32 %v225, %v251
    %v265 = vadd.f32 %v230, %v256
    %v266 = vadd.f32 %v235, %v261
    %v267 = vtanh.pop %v263
    %v268 = vtanh.pop %v264
    %v269 = vtanh.pop %v265
    %v270 = vtanh.pop %v266
    %v272 = vsel %vm138, %v45, 0
    %274 = vmatprep.subr.mxu0 0.0
    %275 = vmatpush1.msra.mxu0 %v267
    %276 = vmatprep.subr.mxu0 0.0
    %277 = vmatpush1.msra.mxu0 %v268
    %278 = vmatprep.subr.mxu0 0.0
    %279 = vmatpush1.msra.mxu0 %v269
    %280 = vmatprep.subr.mxu0 0.0
    %281 = vmatpush1.msra.mxu0 %v270
    %282 = vmatprep.subr.mxu0 0.0
    %283 = vmatpush1.msra.mxu0 0.0
    %284 = vmatprep.subr.mxu0 0.0
    %285 = vmatpush1.msra.mxu0 0.0
    %286 = vmatprep.subr.mxu0 0.0
    %287 = vmatpush1.msra.mxu0 0.0
    %288 = vmatprep.subr.mxu0 0.0
    %289 = vmatpush1.msra.mxu0 0.0
    %290 = vmatprep.subr.mxu0 0.0
    %291 = vmatpush1.msra.mxu0 0.0
    %292 = vmatprep.subr.mxu0 0.0
    %293 = vmatpush1.msra.mxu0 0.0
    %294 = vmatprep.subr.mxu0 0.0
    %295 = vmatpush1.msra.mxu0 0.0
    %296 = vmatprep.subr.mxu0 0.0
    %297 = vmatpush1.msra.mxu0 0.0
    %298 = vmatprep.subr.mxu0 0.0
    %299 = vmatpush1.msra.mxu0 0.0
    %300 = vmatprep.subr.mxu0 0.0
    %301 = vmatpush1.msra.mxu0 0.0
    %302 = vmatprep.subr.mxu0 0.0
    %303 = vmatpush1.msra.mxu0 0.0
    %304 = vmatprep.subr.mxu0 0.0
    %305 = vmatpush1.msra.mxu0 0.0
    %306 = vmatprep.subr.mxu0 0.0
    %307 = vmatpush1.msra.mxu0 0.0
    %308 = vmatprep.subr.mxu0 0.0
    %309 = vmatpush1.msra.mxu0 0.0
    %310 = vmatprep.subr.mxu0 0.0
    %311 = vmatpush1.msra.mxu0 0.0
    %312 = vmatprep.subr.mxu0 0.0
    %313 = vmatpush1.msra.mxu0 0.0
    %314 = vmatprep.subr.mxu0 0.0
    %315 = vmatpush1.msra.mxu0 0.0
    %316 = vmatprep.subr.mxu0 0.0
    %317 = vmatpush1.msra.mxu0 0.0
    %318 = vmatprep.subr.mxu0 0.0
    %319 = vmatpush1.msra.mxu0 0.0
    %320 = vmatprep.subr.mxu0 0.0
    %321 = vmatpush1.msra.mxu0 0.0
    %322 = vmatprep.subr.mxu0 0.0
    %323 = vmatpush1.msra.mxu0 0.0
    %324 = vmatprep.subr.mxu0 0.0
    %325 = vmatpush1.msra.mxu0 0.0
    %326 = vmatprep.subr.mxu0 0.0
    %327 = vmatpush1.msra.mxu0 0.0
    %328 = vmatprep.subr.mxu0 0.0
    %329 = vmatpush1.msra.mxu0 0.0
    %330 = vmatprep.subr.mxu0 0.0
    %331 = vmatpush1.msra.mxu0 0.0
    %332 = vmatprep.subr.mxu0 0.0
    %333 = vmatpush1.msra.mxu0 0.0
    %334 = vmatprep.subr.mxu0 0.0
    %335 = vmatpush1.msra.mxu0 0.0
    %336 = vmatprep.subr.mxu0 0.0
    %337 = vmatpush1.msra.mxu0 0.0
    %338 = vmatprep.mubr.f32.mxu0 0.0
    %339 = vmatmul.mubr.f32.gmra.mrb[0].mxu0 %v272
    %v340 = vpop.f32.mrb[0].mxu0
    %v341 = vadd.f32 0.0, %v340
    %v342 = vpop.f32.mrb[0].mxu0
    %343 = vdwg.mxu0
    %vm344 = vcmp.eq.s32.totalorder %v80, 0
    %v345 = vlaneseq
    %v346 = vshrl.u32 %v345, 7
    %v347 = vsub.s32 0, %v346
    %v348 = vrot.slane %v341, %v347
    %v349 = vsel %vm344, %v348, 0.0
    %v350 = vld [vmem:[#allocation2 + $0x1] sm:$0x1]
    %v351 = vld [vmem:[#allocation2 + $0x3] sm:$0x1]
    %v352 = vld [vmem:[#allocation2 + $0x5] sm:$0x1]
    %v353 = vld [vmem:[#allocation2 + $0x7] sm:$0x1]
    %v354 = vld [vmem:[#allocation2 + $0x9] sm:$0x1]
    %v355 = vld [vmem:[#allocation2 + $0xb] sm:$0x1]
    %v356 = vld [vmem:[#allocation2 + $0xd] sm:$0x1]
    %v357 = vld [vmem:[#allocation2 + $0xf] sm:$0x1]
    %v366 = vrot.slane %v351, 7
    %v367 = vsel %vm118, %v366, %v350
    %v368 = vrot.slane %v352, 6
    %v369 = vsel %vm121, %v368, %v367
    %v370 = vrot.slane %v353, 5
    %v371 = vsel %vm124, %v370, %v369
    %v372 = vrot.slane %v354, 4
    %v373 = vsel %vm127, %v372, %v371
    %v374 = vrot.slane %v355, 3
    %v375 = vsel %vm130, %v374, %v373
    %v376 = vrot.slane %v356, 2
    %v377 = vsel %vm133, %v376, %v375
    %v378 = vrot.slane %v357, 1
    %v379 = vsel %vm136, %v378, %v377
    %v380 = vsel %vm138, %v379, 0
    %382 = vmatprep.subr.mxu0 0.0
    %383 = vmatpush1.xpose.msra.mxu0 %v380
    %384 = vmatprep.subr.mxu0 0.0
    %385 = vmatpush1.xpose.msra.mxu0 0.0
    %386 = vmatprep.subr.mxu0 0.0
    %387 = vmatpush1.xpose.msra.mxu0 0.0
    %388 = vmatprep.subr.mxu0 0.0
    %389 = vmatpush1.xpose.msra.mxu0 0.0
    %390 = vmatprep.subr.mxu0 0.0
    %391 = vmatpush1.xpose.msra.mxu0 0.0
    %392 = vmatprep.subr.mxu0 0.0
    %393 = vmatpush1.xpose.msra.mxu0 0.0
    %394 = vmatprep.subr.mxu0 0.0
    %395 = vmatpush1.xpose.msra.mxu0 0.0
    %396 = vmatprep.subr.mxu0 0.0
    %397 = vmatpush1.xpose.msra.mxu0 0.0
    %398 = vmatprep.subr.mxu0 0.0
    %399 = vmatpush1.xpose.msra.mxu0 0.0
    %400 = vmatprep.subr.mxu0 0.0
    %401 = vmatpush1.xpose.msra.mxu0 0.0
    %402 = vmatprep.subr.mxu0 0.0
    %403 = vmatpush1.xpose.msra.mxu0 0.0
    %404 = vmatprep.subr.mxu0 0.0
    %405 = vmatpush1.xpose.msra.mxu0 0.0
    %406 = vmatprep.subr.mxu0 0.0
    %407 = vmatpush1.xpose.msra.mxu0 0.0
    %408 = vmatprep.subr.mxu0 0.0
    %409 = vmatpush1.xpose.msra.mxu0 0.0
    %410 = vmatprep.subr.mxu0 0.0
    %411 = vmatpush1.xpose.msra.mxu0 0.0
    %412 = vmatprep.subr.mxu0 0.0
    %413 = vmatpush1.xpose.msra.mxu0 0.0
    %414 = vmatprep.subr.mxu0 0.0
    %415 = vmatpush1.xpose.msra.mxu0 0.0
    %416 = vmatprep.subr.mxu0 0.0
    %417 = vmatpush1.xpose.msra.mxu0 0.0
    %418 = vmatprep.subr.mxu0 0.0
    %419 = vmatpush1.xpose.msra.mxu0 0.0
    %420 = vmatprep.subr.mxu0 0.0
    %421 = vmatpush1.xpose.msra.mxu0 0.0
    %422 = vmatprep.subr.mxu0 0.0
    %423 = vmatpush1.xpose.msra.mxu0 0.0
    %424 = vmatprep.subr.mxu0 0.0
    %425 = vmatpush1.xpose.msra.mxu0 0.0
    %426 = vmatprep.subr.mxu0 0.0
    %427 = vmatpush1.xpose.msra.mxu0 0.0
    %428 = vmatprep.subr.mxu0 0.0
    %429 = vmatpush1.xpose.msra.mxu0 0.0
    %430 = vmatprep.subr.mxu0 0.0
    %431 = vmatpush1.xpose.msra.mxu0 0.0
    %432 = vmatprep.subr.mxu0 0.0
    %433 = vmatpush1.xpose.msra.mxu0 0.0
    %434 = vmatprep.subr.mxu0 0.0
    %435 = vmatpush1.xpose.msra.mxu0 0.0
    %436 = vmatprep.subr.mxu0 0.0
    %437 = vmatpush1.xpose.msra.mxu0 0.0
    %438 = vmatprep.subr.mxu0 0.0
    %439 = vmatpush1.xpose.msra.mxu0 0.0
    %440 = vmatprep.subr.mxu0 0.0
    %441 = vmatpush1.xpose.msra.mxu0 0.0
    %442 = vmatprep.subr.mxu0 0.0
    %443 = vmatpush1.xpose.msra.mxu0 0.0
    %444 = vmatprep.subr.mxu0 0.0
    %445 = vmatpush1.xpose.msra.mxu0 0.0
    %446 = vmatprep.mubr.f32.mxu0 0.0
    %447 = vmatmul.mubr.f32.gmra.mrb[0].mxu0 %v140
    %v448 = vpop.f32.mrb[0].mxu0
    %v449 = vadd.f32 %v92, %v448
    %v450 = vpop.f32.mrb[0].mxu0
    %451 = vmatprep.mubr.f32.mxu0 0.0
    %452 = vmatmul.mubr.f32.gmra.mrb[0].mxu0 %v143
    %v453 = vpop.f32.mrb[0].mxu0
    %v454 = vadd.f32 %v97, %v453
    %v455 = vpop.f32.mrb[0].mxu0
    %456 = vmatprep.mubr.f32.mxu0 0.0
    %457 = vmatmul.mubr.f32.gmra.mrb[0].mxu0 %v146
    %v458 = vpop.f32.mrb[0].mxu0
    %v459 = vadd.f32 %v102, %v458
    %v460 = vpop.f32.mrb[0].mxu0
    %461 = vmatprep.mubr.f32.mxu0 0.0
    %462 = vmatmul.mubr.f32.gmra.mrb[0].mxu0 %v149
    %v463 = vpop.f32.mrb[0].mxu0
    %v464 = vadd.f32 %v107, %v463
    %v465 = vpop.f32.mrb[0].mxu0
    %466 = vdwg.mxu0
    %s467 = scalar_lea.vmem %s5, 32
    %468 = vst.msk [vmem:[%s467] sm:$0xff] %vm238, %v449
    %469 = vst.msk [vmem:[%s467 + $0x8] sm:$0xff] %vm238, %v454
    %470 = vst.msk [vmem:[%s467 + $0x10] sm:$0xff] %vm238, %v459
    %471 = vst.msk [vmem:[%s467 + $0x18] sm:$0xff] %vm238, %v464
    %472 = vset.pattern.permute.xlu0 1
    %473 = vperm.xlu0 %472, %v63
    %v474 = vpop.permute.xlu0 %473
    %476 = vset.pattern.permute.xlu0 1
    %477 = vperm.xlu0 %476, %v64
    %v478 = vpop.permute.xlu0 %477
    %480 = vset.pattern.permute.xlu0 1
    %481 = vperm.xlu0 %480, %v65
    %v482 = vpop.permute.xlu0 %481
    %484 = vset.pattern.permute.xlu0 1
    %485 = vperm.xlu0 %484, %v66
    %v486 = vpop.permute.xlu0 %485
    %v488 = vadd.f32 %v449, %v474
    %v489 = vadd.f32 %v454, %v478
    %v490 = vadd.f32 %v459, %v482
    %v491 = vadd.f32 %v464, %v486
    %v492 = vtanh.pop %v488
    %v493 = vtanh.pop %v489
    %v494 = vtanh.pop %v490
    %v495 = vtanh.pop %v491
    %496 = vmatprep.subr.mxu0 0.0
    %497 = vmatpush1.msra.mxu0 %v492
    %498 = vmatprep.subr.mxu0 0.0
    %499 = vmatpush1.msra.mxu0 %v493
    %500 = vmatprep.subr.mxu0 0.0
    %501 = vmatpush1.msra.mxu0 %v494
    %502 = vmatprep.subr.mxu0 0.0
    %503 = vmatpush1.msra.mxu0 %v495
    %504 = vmatprep.subr.mxu0 0.0
    %505 = vmatpush1.msra.mxu0 0.0
    %506 = vmatprep.subr.mxu0 0.0
    %507 = vmatpush1.msra.mxu0 0.0
    %508 = vmatprep.subr.mxu0 0.0
    %509 = vmatpush1.msra.mxu0 0.0
    %510 = vmatprep.subr.mxu0 0.0
    %511 = vmatpush1.msra.mxu0 0.0
    %512 = vmatprep.subr.mxu0 0.0
    %513 = vmatpush1.msra.mxu0 0.0
    %514 = vmatprep.subr.mxu0 0.0
    %515 = vmatpush1.msra.mxu0 0.0
    %516 = vmatprep.subr.mxu0 0.0
    %517 = vmatpush1.msra.mxu0 0.0
    %518 = vmatprep.subr.mxu0 0.0
    %519 = vmatpush1.msra.mxu0 0.0
    %520 = vmatprep.subr.mxu0 0.0
    %521 = vmatpush1.msra.mxu0 0.0
    %522 = vmatprep.subr.mxu0 0.0
    %523 = vmatpush1.msra.mxu0 0.0
    %524 = vmatprep.subr.mxu0 0.0
    %525 = vmatpush1.msra.mxu0 0.0
    %526 = vmatprep.subr.mxu0 0.0
    %527 = vmatpush1.msra.mxu0 0.0
    %528 = vmatprep.subr.mxu0 0.0
    %529 = vmatpush1.msra.mxu0 0.0
    %530 = vmatprep.subr.mxu0 0.0
    %531 = vmatpush1.msra.mxu0 0.0
    %532 = vmatprep.subr.mxu0 0.0
    %533 = vmatpush1.msra.mxu0 0.0
    %534 = vmatprep.subr.mxu0 0.0
    %535 = vmatpush1.msra.mxu0 0.0
    %536 = vmatprep.subr.mxu0 0.0
    %537 = vmatpush1.msra.mxu0 0.0
    %538 = vmatprep.subr.mxu0 0.0
    %539 = vmatpush1.msra.mxu0 0.0
    %540 = vmatprep.subr.mxu0 0.0
    %541 = vmatpush1.msra.mxu0 0.0
    %542 = vmatprep.subr.mxu0 0.0
    %543 = vmatpush1.msra.mxu0 0.0
    %544 = vmatprep.subr.mxu0 0.0
    %545 = vmatpush1.msra.mxu0 0.0
    %546 = vmatprep.subr.mxu0 0.0
    %547 = vmatpush1.msra.mxu0 0.0
    %548 = vmatprep.subr.mxu0 0.0
    %549 = vmatpush1.msra.mxu0 0.0
    %550 = vmatprep.subr.mxu0 0.0
    %551 = vmatpush1.msra.mxu0 0.0
    %552 = vmatprep.subr.mxu0 0.0
    %553 = vmatpush1.msra.mxu0 0.0
    %554 = vmatprep.subr.mxu0 0.0
    %555 = vmatpush1.msra.mxu0 0.0
    %556 = vmatprep.subr.mxu0 0.0
    %557 = vmatpush1.msra.mxu0 0.0
    %558 = vmatprep.subr.mxu0 0.0
    %559 = vmatpush1.msra.mxu0 0.0
    %560 = vmatprep.mubr.f32.mxu0 0.0
    %561 = vmatmul.mubr.f32.gmra.mrb[0].mxu0 %v272
    %v562 = vpop.f32.mrb[0].mxu0
    %v563 = vadd.f32 0.0, %v562
    %v564 = vpop.f32.mrb[0].mxu0
    %565 = vdwg.mxu0
    %vm566 = vcmp.eq.s32.totalorder %v80, 1
    %v567 = vlaneseq
    %v568 = vshrl.u32 %v567, 7
    %v569 = vsub.s32 0, %v568
    %v570 = vrot.slane %v563, %v569
    %v571 = vsel %vm566, %v570, %v349
    %vm572 = vcmask 58368
    %573 = vst.msk [vmem:[#allocation5] sm:$0x3] %vm572, %v571
    // Predicated region
    $region26: #{tpu_custom_call.1} parent=1 // pred_check
      _
    $region27: #{tpu_custom_call.1} parent=1 // pred_check_branch
      %575 = sbr.rel (0) target = $region29
    $region28: #{tpu_custom_call.1} parent=1 // pred_region
      _
    $region29: #{tpu_custom_call.1} parent=1 // pred_fallthru
      _
    // Predicated region
    $region30: #{tpu_custom_call.1} parent=1 // pred_check
      _
    $region31: #{tpu_custom_call.1} parent=1 // pred_check_branch
      %577 = sbr.rel (0) target = $region33
    $region32: #{tpu_custom_call.1} parent=1 // pred_region
      %s579 = ssub.s32 32, 32
      %580 = vsyncadd [#allocation4], %s579
      %s582 = sshll.u32 [#allocation5], 4
      %s583 = int_to_ptr.vmem [resolvable:$true] %s582
      %585 = dma.vmem_to_hbm [thread:$0]  %s583, 32, %s6, [#allocation4]
    $region33: #{tpu_custom_call.1} parent=1 // pred_fallthru
      _
    // Predicated region
    $region34: #{tpu_custom_call.1} parent=1 // pred_check
      _
    $region35: #{tpu_custom_call.1} parent=1 // pred_check_branch
      %587 = sbr.rel (0) target = $region37
    $region36: #{tpu_custom_call.1} parent=1 // pred_region
      _
    $region37: #{tpu_custom_call.1} parent=1 // pred_fallthru
      _
    // Predicated region
    $region38: #{tpu_custom_call.1} parent=1 // pred_check
      _
    $region39: #{tpu_custom_call.1} parent=1 // pred_check_branch
      %589 = sbr.rel (0) target = $region41
    $region40: #{tpu_custom_call.1} parent=1 // pred_region
      %590 = dma.done [#allocation4], 32
    $region41: #{tpu_custom_call.1} parent=1 // pred_fallthru
      _
    %591 = vsyncpa [#allocation3], 1
    %592 = vsyncpa [#allocation4], 1

</llo_original>
